<compile_context>
chip_gen: v7x
topology: tpu7x:2x2x1
jax: 0.10.0
libtpu: 0.0.40
codegen_flags: <defaults>
</compile_context>

<pallas_src>
import math
import functools

import jax
import jax.numpy as jnp
from jax.experimental import pallas as pl
from jax.experimental.pallas import tpu as pltpu


# ---------------------------------------------------------------------------
# Fixed sin-cos encoding table (plain JAX, built once at setup time).
# ---------------------------------------------------------------------------
def _sincos_pos_encoding_1d(projection_size, sequence_length, temperature=10000.0):
    positions = jnp.arange(sequence_length, dtype=jnp.float32)[:, None]      # (S, 1)
    div_term = jnp.exp(
        jnp.arange(0, projection_size, 2, dtype=jnp.float32)
        * (-math.log(temperature) / projection_size)
    )                                                                         # (P/2,)
    enc = jnp.zeros((sequence_length, projection_size), dtype=jnp.float32)
    enc = enc.at[:, 0::2].set(jnp.sin(positions * div_term))
    enc = enc.at[:, 1::2].set(jnp.cos(positions * div_term))
    return enc[None]                                                          # (1, S, P)


def make_nd_sincos_encoding(sequence_length, projection_size, temperature=10000.0):
    """Returns encoding of shape (1, prod(sequence_length), projection_size)."""
    num_dims = len(sequence_length)
    assert projection_size % (2 * num_dims) == 0
    ppd = projection_size // num_dims
    parts = []
    for i, s in enumerate(sequence_length):
        e = _sincos_pos_encoding_1d(ppd, s, temperature)                      # (1, s, ppd)
        shape = [1] + [1] * num_dims + [ppd]
        shape[i + 1] = s
        e = e.reshape(shape)
        e = jnp.broadcast_to(e, (1, *sequence_length, ppd))
        parts.append(e)
    final = jnp.concatenate(parts, axis=-1)                                   # (1, *seq, D)
    return final.reshape(1, -1, projection_size)                              # (1, N, D)


# ---------------------------------------------------------------------------
# Generation-aware VMEM capacity (queried once; conservative v7x fallback).
# ---------------------------------------------------------------------------
def _query_vmem_capacity_bytes():
    try:
        return int(pltpu.get_tpu_info().vmem_capacity_bytes)
    except Exception:
        return 64 << 20      # v7x per-TensorCore VMEM — smallest of the three gens.


_VMEM_CAP = _query_vmem_capacity_bytes()


def _round_up(x, m):
    return ((x + m - 1) // m) * m


# ---------------------------------------------------------------------------
# Tiling selection (trace-time, pure Python on static shapes).
# ---------------------------------------------------------------------------
def _select_tiling(B, N, E, D, x_itemsize, vmem_cap, target_rows=1024):
    """Pick (tile_b, tile_n) for the (N-tiles, batch-tiles) grid.

    * biggest N-tile that fits the generation's VMEM budget (amortizes the
      ~0.35us/grid-step overhead -> near HBM roofline),
    * split the batch (tile_b=1; the inner 'arbitrary' axis reuses the pe
      scratch so nothing is recomputed) before shrinking the N-tile,
    * prefer an even number (>=2) of parallel N-steps so 2-TensorCore parts
      (megacore) get balanced work.
    """
    usable = max(int(vmem_cap * 0.65), 8 << 20)
    fixed = 2 * (D + 1) * E * 4                       # weight + bias blocks (<=2 buffers)

    def per_row_bytes(tb):
        return (4 * tb * E * x_itemsize               # x in + out, double-buffered
                + 2 * D * 4                           # enc (f32), double-buffered
                + E * 4                               # pe scratch
                + tb * E * 4)                         # f32 broadcast-add intermediate

    def max_rows(tb):
        return max(16, ((usable - fixed) // per_row_bytes(tb)) // 16 * 16)

    want = min(_round_up(N, 16), _round_up(max(int(target_rows), 16), 16))

    tile_b = B
    if max_rows(tile_b) < want and B > 1:
        tile_b = 1                                    # split batch before shrinking N-tile
    tile_n = min(want, max_rows(tile_b))
    if tile_n >= N:
        tile_n = N                                    # single full-extent tile (any N is legal)

    # Megacore balance: if the number of parallel N-steps is odd, split to an
    # even count as long as every tile stays reasonably large.
    grid_n = -(-N // tile_n)
    if grid_n % 2 == 1 and N >= 256:
        cand = _round_up(-(-N // (grid_n + 1)), 16)
        if 128 <= cand <= max_rows(tile_b):
            tile_n = cand

    return tile_b, tile_n


# ---------------------------------------------------------------------------
# Pallas kernel: out[bt, nt, :] = x[bt, nt, :] + (enc[nt, :] @ W + bias)
# ---------------------------------------------------------------------------
def _pe_add_kernel(x_ref, enc_ref, w_ref, b_ref, o_ref, pe_ref):
    # Grid = (N-tiles, batch-tiles), batch innermost.  The enc@W + bias
    # projection only depends on the N-tile: compute it once per N-tile (first
    # batch step) into the VMEM scratch and reuse it for the remaining batch
    # steps (saves the redundant enc reads and MXU passes).
    @pl.when(pl.program_id(1) == 0)
    def _():
        pe_ref[...] = (
            jnp.dot(enc_ref[...], w_ref[...], preferred_element_type=jnp.float32)
            + b_ref[...]
        )

    # f32 broadcast-add on the VPU (x is upcast if bf16); cast back on store.
    o_ref[...] = (x_ref[...] + pe_ref[...][None, :, :]).astype(o_ref.dtype)


@functools.partial(jax.jit, static_argnames=("max_tile_rows",))
def nd_sincos_learnt_pe_forward(x, encoding, weight_t, bias, *, max_tile_rows=None):
    """out[b, n, :] = x[b, n, :] + encoding[n, :] @ weight_t + bias.

    x: (B, N, E) f32/bf16; encoding: (N, D) f32; weight_t: (D, E) f32 (the
    nn.Linear weight pre-transposed once at init); bias: (E,) f32.
    """
    B, N, E = x.shape
    D = encoding.shape[-1]
    x_itemsize = jnp.dtype(x.dtype).itemsize

    tile_b, tile_n = _select_tiling(
        B, N, E, D, x_itemsize, _VMEM_CAP,
        target_rows=(max_tile_rows if max_tile_rows is not None else 1024))
    grid_n = pl.cdiv(N, tile_n)          # ragged tail handled by a partial block
    grid_b = B // tile_b                 # tile_b is B or 1, always exact

    enc = encoding.astype(jnp.float32)   # keep f32: exact parity with PyTorch Linear
    w_t = weight_t.astype(jnp.float32)
    bias2d = bias.reshape(1, E).astype(jnp.float32)

    # VMEM estimate (x I/O + enc double-buffered, weight/bias, pe scratch,
    # f32 add intermediate) and a generation-aware limit.
    fp = (4 * tile_b * tile_n * E * x_itemsize
          + 2 * tile_n * D * 4
          + 2 * (D + 1) * E * 4
          + tile_n * E * 4
          + tile_b * tile_n * E * 4)
    vmem_limit = int(min(max(fp * 1.3 + (4 << 20), 32 << 20), _VMEM_CAP * 0.80))
    vmem_limit = max(vmem_limit, int(fp * 1.2) + (1 << 20))

    # Constant-index weight/bias blocks: double-buffering them is pure VMEM
    # waste; single-buffer them once they are big enough to matter (kept off
    # for small D*E where it is negligible).
    wb_kwargs = (dict(pipeline_mode=pl.Buffered(1))
                 if D * E * 4 >= (2 << 20) else {})

    grid_spec = pltpu.PrefetchScalarGridSpec(
        num_scalar_prefetch=0,
        grid=(grid_n, grid_b),           # batch innermost: pe scratch reused across it
        in_specs=[
            pl.BlockSpec((tile_b, tile_n, E), lambda i, b: (b, i, 0)),    # x
            pl.BlockSpec((tile_n, D), lambda i, b: (i, 0)),               # encoding
            pl.BlockSpec((D, E), lambda i, b: (0, 0), **wb_kwargs),       # weight (D, E)
            pl.BlockSpec((1, E), lambda i, b: (0, 0), **wb_kwargs),       # bias
        ],
        out_specs=pl.BlockSpec((tile_b, tile_n, E), lambda i, b: (b, i, 0)),
        scratch_shapes=[pltpu.VMEM((tile_n, E), jnp.float32)],            # pe per N-tile
    )
    return pl.pallas_call(
        _pe_add_kernel,
        out_shape=jax.ShapeDtypeStruct((B, N, E), x.dtype),
        grid_spec=grid_spec,
        compiler_params=pltpu.CompilerParams(
            dimension_semantics=("parallel", "arbitrary"),
            vmem_limit_bytes=vmem_limit,
        ),
    )(x, enc, w_t, bias2d)


def module_forward(x, encoding, weight_t, bias, cls_token=None, max_tile_rows=None):
    """Full forward matching NdSinCosLearntPositionEncoding.forward.

    weight_t: (D, E) — the nn.Linear weight pre-transposed ONCE at init time.
    bias: (E,).  encoding: (1, N, D) fixed sin-cos table.
    """
    B, N, E = x.shape
    D = encoding.shape[-1]
    out = nd_sincos_learnt_pe_forward(x, encoding.reshape(N, D), weight_t, bias,
                                      max_tile_rows=max_tile_rows)
    if cls_token is not None:
        # cat happens AFTER adding PE (encode_cls_token=False).
        # TODO(synk): fusing this concat into the pallas_call needs a +1-row
        # element-offset out index_map (or a serializing row-carry), which
        # block-granular BlockSpecs cannot express; kept as one plain-JAX pass.
        cls = jnp.broadcast_to(cls_token[None], (B, 1, E)).astype(out.dtype)
        out = jnp.concatenate([cls, out], axis=1)
    return out


if __name__ == "__main__":
    def run_case(name, seq, hidden_dim, dim, E, B, x_dtype=jnp.float32,
                 max_tile_rows=None, atol=1e-2, rtol=1e-2, check_cls=False):
        N = math.prod(seq)
        D = hidden_dim * dim
        key = jax.random.PRNGKey(0)
        kx, kw, kb, kc = jax.random.split(key, 4)

        x = jax.random.normal(kx, (B, N, E), dtype=jnp.float32).astype(x_dtype)
        # Deterministic nn.Linear(D, E) init: U(-1/sqrt(D), 1/sqrt(D)).
        bound = 1.0 / math.sqrt(D)
        weight = jax.random.uniform(kw, (E, D), minval=-bound, maxval=bound,
                                    dtype=jnp.float32)
        bias = jax.random.uniform(kb, (E,), minval=-bound, maxval=bound,
                                  dtype=jnp.float32)
        weight_t = jnp.asarray(weight.T)                     # stored (D, E) at init
        encoding = make_nd_sincos_encoding(seq, D, 10000.0)  # (1, N, D)

        out = module_forward(x, encoding, weight_t, bias, cls_token=None,
                             max_tile_rows=max_tile_rows)
        out = jax.block_until_ready(out)
        assert out.shape == (B, N, E), (name, out.shape)

        enc2d = encoding.reshape(N, D)
        ref = x.astype(jnp.float32) + (enc2d @ weight_t + bias)[None]
        assert jnp.allclose(out.astype(jnp.float32), ref, atol=atol, rtol=rtol), name

        if check_cls:
            cls_token = jax.random.normal(kc, (1, E), dtype=jnp.float32)
            out_cls = jax.block_until_ready(
                module_forward(x, encoding, weight_t, bias, cls_token=cls_token,
                               max_tile_rows=max_tile_rows))
            assert out_cls.shape == (B, N + 1, E), name
            assert jnp.allclose(out_cls[:, 1:].astype(jnp.float32),
                                out.astype(jnp.float32), atol=1e-6), name
            assert jnp.allclose(out_cls[:, 0].astype(jnp.float32),
                                jnp.broadcast_to(cls_token, (B, E)), atol=1e-6), name

    # 1) Aligned shapes — module defaults (dim=2, seq (16,16) -> N=256,
    #    hidden_dim=32 -> D=64, projection_size E=128), plus the cls-token path.
    run_case("aligned_f32", (16, 16), 32, 2, 128, B=2, check_cls=True)

    # 2) Ragged N (200) + non-128-multiple E (96) with a forced multi-tile grid:
    #    exercises the no-pad / partial-tail-block path.
    run_case("ragged", (10, 20), 32, 2, 96, B=2, max_tile_rows=128)

    # 3) bf16 activations (the remaining ~2x HBM lever); pe math stays f32.
    run_case("bf16_x", (16, 16), 32, 2, 128, B=2, x_dtype=jnp.bfloat16,
             atol=3e-2, rtol=3e-2)

    print("KERNEL_OK")
</pallas_src>

<mosaic_0001>
module attributes {stable_mosaic.version = 11 : i64} {
  func.func @_pe_add_kernel(%arg0: i32, %arg1: i32, %arg2: memref<2x128x128xf32, #tpu.memory_space<vmem>>, %arg3: memref<128x64xf32, #tpu.memory_space<vmem>>, %arg4: memref<64x128xf32, #tpu.memory_space<vmem>>, %arg5: memref<1x128xf32, #tpu.memory_space<vmem>>, %arg6: memref<2x128x128xf32, #tpu.memory_space<vmem>>, %arg7: memref<128x128xf32, #tpu.memory_space<vmem>>) attributes {dimension_semantics = [#tpu.dimension_semantics<parallel>, #tpu.dimension_semantics<arbitrary>], iteration_bounds = array<i64: 2, 1>, scalar_prefetch = 0 : i64, scratch_operands = 1 : i64, tpu.core_type = #tpu.core_type<tc>, window_params = [{transform_indices = @transform_0, window_bounds = array<i64: 2, 128, 128>}, {transform_indices = @transform_1, window_bounds = array<i64: 128, 64>}, {pipeline_mode = #tpu.pipeline_mode<synchronous>, transform_indices = @transform_2, window_bounds = array<i64: 64, 128>}, {pipeline_mode = #tpu.pipeline_mode<synchronous>, transform_indices = @transform_3, window_bounds = array<i64: 1, 128>}, {transform_indices = @transform_4, window_bounds = array<i64: 2, 128, 128>}]} {
    %c0_i32 = arith.constant 0 : i32
    %0 = arith.cmpi eq, %arg1, %c0_i32 : i32
    %1 = arith.extui %0 : i1 to i32
    %c0_i32_0 = arith.constant 0 : i32
    %2 = arith.cmpi ne, %1, %c0_i32_0 : i32
    scf.if %2 {
      %c0_8 = arith.constant 0 : index
      %c0_9 = arith.constant 0 : index
      %9 = vector.load %arg3[%c0_8, %c0_9] : memref<128x64xf32, #tpu.memory_space<vmem>>, vector<128x64xf32>
      %c0_10 = arith.constant 0 : index
      %c0_11 = arith.constant 0 : index
      %10 = vector.load %arg4[%c0_10, %c0_11] : memref<64x128xf32, #tpu.memory_space<vmem>>, vector<64x128xf32>
      %cst = arith.constant dense<0.000000e+00> : vector<128x128xf32>
      %11 = tpu.matmul %9, %10, %cst {dimension_numbers = #tpu.dot_dimension_numbers<[1], [0], [0], [1], [0, 0, 1, 1], [], []>} : vector<128x64xf32>, vector<64x128xf32>, vector<128x128xf32> -> vector<128x128xf32>
      %c0_12 = arith.constant 0 : index
      %c0_13 = arith.constant 0 : index
      %12 = vector.load %arg5[%c0_12, %c0_13] : memref<1x128xf32, #tpu.memory_space<vmem>>, vector<1x128xf32>
      %13 = vector.broadcast %12 : vector<1x128xf32> to vector<128x128xf32>
      %14 = arith.addf %11, %13 : vector<128x128xf32>
      %c0_14 = arith.constant 0 : index
      %c0_15 = arith.constant 0 : index
      %15 = vector.load %arg7[%c0_14, %c0_15] : memref<128x128xf32, #tpu.memory_space<vmem>>, vector<128x128xf32>
      tpu.vector_store %arg7[%c0_14, %c0_15], %14 {strides = array<i32>} : memref<128x128xf32, #tpu.memory_space<vmem>>, vector<128x128xf32>,
    } else {
    }
    %c0 = arith.constant 0 : index
    %c0_1 = arith.constant 0 : index
    %c0_2 = arith.constant 0 : index
    %3 = vector.load %arg2[%c0, %c0_1, %c0_2] : memref<2x128x128xf32, #tpu.memory_space<vmem>>, vector<2x128x128xf32>
    %c0_3 = arith.constant 0 : index
    %c0_4 = arith.constant 0 : index
    %4 = vector.load %arg7[%c0_3, %c0_4] : memref<128x128xf32, #tpu.memory_space<vmem>>, vector<128x128xf32>
    %5 = vector.shape_cast %4 : vector<128x128xf32> to vector<1x128x128xf32>
    %6 = vector.broadcast %5 : vector<1x128x128xf32> to vector<2x128x128xf32>
    %7 = arith.addf %3, %6 : vector<2x128x128xf32>
    %c0_5 = arith.constant 0 : index
    %c0_6 = arith.constant 0 : index
    %c0_7 = arith.constant 0 : index
    %8 = vector.load %arg6[%c0_5, %c0_6, %c0_7] : memref<2x128x128xf32, #tpu.memory_space<vmem>>, vector<2x128x128xf32>
    tpu.vector_store %arg6[%c0_5, %c0_6, %c0_7], %7 {strides = array<i32>} : memref<2x128x128xf32, #tpu.memory_space<vmem>>, vector<2x128x128xf32>,
    return
  }
  func.func @transform_0(%arg0: i32, %arg1: i32) -> (i32, i32, i32) {
    %c0_i32 = arith.constant 0 : i32
    %c0_i32_0 = arith.constant 0 : i32
    return %arg1, %arg0, %c0_i32 : i32, i32, i32
  }
  func.func @transform_1(%arg0: i32, %arg1: i32) -> (i32, i32) {
    %c0_i32 = arith.constant 0 : i32
    %c0_i32_0 = arith.constant 0 : i32
    return %arg0, %c0_i32 : i32, i32
  }
  func.func @transform_2(%arg0: i32, %arg1: i32) -> (i32, i32) {
    %c0_i32 = arith.constant 0 : i32
    %c0_i32_0 = arith.constant 0 : i32
    %c0_i32_1 = arith.constant 0 : i32
    return %c0_i32, %c0_i32_0 : i32, i32
  }
  func.func @transform_3(%arg0: i32, %arg1: i32) -> (i32, i32) {
    %c0_i32 = arith.constant 0 : i32
    %c0_i32_0 = arith.constant 0 : i32
    %c0_i32_1 = arith.constant 0 : i32
    return %c0_i32, %c0_i32_0 : i32, i32
  }
  func.func @transform_4(%arg0: i32, %arg1: i32) -> (i32, i32, i32) {
    %c0_i32 = arith.constant 0 : i32
    %c0_i32_0 = arith.constant 0 : i32
    return %arg1, %arg0, %c0_i32 : i32, i32, i32
  }
}

</mosaic_0001>

<llo_original>
// kernel: nd_sincos_learnt_pe_forward.1
$region0: #{nd_sincos_learnt_pe_forward.1}
  #allocation0 [shape = 'u32[]', space=smem, size = 0x4, offset = 0x4, fixed_abs, tag = 'smem constant byte address 0x4 - core index']
  #allocation1 [shape = 'u32[144,128]{1,0:T(1,128)}', space=vmem, size = 0x12000, scoped, tag = 'internal scratch']
  #allocation2 [shape = 'f32[128,128]{1,0:T(8,128)}', space=vmem, size = 0x10000, scoped, tag = 'scratch operand']
  #allocation7 [shape = 's32[]', space=sflag, size = 0x4, offset = 0, fixed_abs, tag = 'sflag constant byte address 0x0 - dummy sync flag']
  #allocation9 [shape = 's32[]', space=sflag, size = 0x4, offset = 0, fixed_abs, tag = 'sflag constant byte address 0x0 - dummy sync flag']
  %s0 = inlined_call_operand.hbm [shape: f32[2,256,128], index: 0, kind: input, shape index: {}]
  %s1 = inlined_call_operand.vmem [shape: f32[256,64], index: 1, kind: input, shape index: {}]
  %s2 = inlined_call_operand.vmem [shape: f32[64,128], index: 2, kind: input, shape index: {}]
  %s3 = inlined_call_operand.vmem [shape: f32[1,128], index: 3, kind: input, shape index: {}]
  %s4 = inlined_call_operand.hbm [shape: f32[2,256,128], index: 4, kind: output, shape index: {}]
  %s5 = sld [smem:[#allocation0]]
  $region57: #{nd_sincos_learnt_pe_forward.1} parent=0
    _
  %s7 = ssub.s32 1, %s5
  %s8 = scalar_select 0, %s7, %s5
  $region1: #{nd_sincos_learnt_pe_forward.1} parent=0
    #allocation3 [shape = 'u8[262144]{0}', space=vmem, size = 0x40000, scoped, tag = 'input window, operand 0']
    #allocation4 [shape = 's32[2]{0}', space=sflag, size = 0x8, scoped, tag = 'scoped memory for nd_sincos_learnt_pe_forward.1']
    #allocation5 [shape = 's32[2]{0}', space=sflag, size = 0x8, scoped, tag = 'scoped memory for nd_sincos_learnt_pe_forward.1']
    #allocation6 [shape = 'u8[262144]{0}', space=vmem, size = 0x40000, scoped, tag = 'output window, operand 0']
    %9 = vsyncpa [#allocation4], 0
    %s10 = scalar_lea.sflag [#allocation4], 1
    %11 = vsyncpa %s10, 0
    %12 = vsyncpa [#allocation5], 0
    %s13 = scalar_lea.sflag [#allocation5], 1
    %14 = vsyncpa %s13, 0
    loop: start=0, step=1, limit=4
    $region2: #{nd_sincos_learnt_pe_forward.1} parent=1 // loop_pre_header
      _
    $region3: #{nd_sincos_learnt_pe_forward.1} parent=1 // loop_header
      %s16 = sphi 0, %s20
      %p17 = scmp.ge.s32.totalorder %s16, 4
      %s23 = sphi 0, %s35
      %s24 = sphi 0, %s31
      %s25 = sphi 0, %s23
      %s26 = sphi 0, %s24
      %s27 = sphi 0, %s25
      %s28 = sphi 0, %s26
      %s40 = sphi 0, %s42
      %s43 = sphi 0, %s40
      %s44 = sphi 0, %s43
      %s60 = sphi 0, %s44
      %s66 = sphi 0, %s68
      %s69 = sphi 0, %s66
      %s70 = sphi 0, %s69
      %s86 = sphi 0, %s70
      %s90 = sphi 0, %s90
      %s92 = sphi 0, %s90
      %s93 = sphi 0, %s92
      %s107 = sphi 0, %s93
      %s111 = sphi 0, %s111
      %s113 = sphi 0, %s111
      %s114 = sphi 0, %s113
      %s128 = sphi 0, %s114
      %s136 = sphi 0, %s138
      %s139 = sphi 0, %s136
      %s140 = sphi 0, %s139
      %s156 = sphi 0, %s140
    $region4: #{nd_sincos_learnt_pe_forward.1} parent=1 // loop_header_branch
      %19 = sbr.rel (%p17) target = $region8
    $region5: #{nd_sincos_learnt_pe_forward.1} parent=1 // loop_body
      %s21 = ssub.s32 %s16, 1
      %s22 = ssub.s32 %s16, 2
      %s29 = sadd.s32 1, %s24
      %p30 = scmp.ge.s32.totalorder %s29, 1
      %s31 = scalar_select %p30, 0, %s29
      %s32 = sadd.s32 1, %s23
      %s33 = scalar_select %p30, %s32, %s23
      %p34 = scmp.ge.s32.totalorder %s33, 2
      %s35 = scalar_select %p34, 0, %s33
      %s36 = ssub.s32 %s24, %s31
      %s37 = ssub.s32 %s23, %s35
      %s38 = sor.u32 %s36, %s37
      %p39 = scmp.eq.s32.totalorder %s38, 0
      %s41 = sadd.s32 %s40, 1
      %s42 = scalar_select %p39, %s40, %s41
      %p45 = pneg %p39
      %p46 = scmp.eq.s32.totalorder %s16, 1
      %p47 = por %p45, %p46
      %p48 = scmp.ne.s32.totalorder %s40, %s43
      %p49 = scmp.eq.s32.totalorder %s16, 0
      %p50 = por %p48, %p49
      %p51 = scmp.ne.s32.totalorder %s40, %s43
      %p52 = scmp.eq.s32.totalorder %s21, 1
      %p53 = por %p51, %p52
      %p54 = scmp.ne.s32.totalorder %s43, %s44
      %p55 = scmp.eq.s32.totalorder %s21, 0
      %p56 = por %p54, %p55
      %p57 = scmp.ne.s32.totalorder %s43, %s44
      %p58 = scmp.eq.s32.totalorder %s22, 1
      %p59 = por %p57, %p58
      %p61 = scmp.ne.s32.totalorder %s44, %s60
      %p62 = scmp.eq.s32.totalorder %s22, 0
      %p63 = por %p61, %p62
      %s64 = ssub.s32 %s23, %s35
      %p65 = scmp.eq.s32.totalorder %s64, 0
      %s67 = sadd.s32 %s66, 1
      %s68 = scalar_select %p65, %s66, %s67
      %p71 = pneg %p65
      %p72 = scmp.eq.s32.totalorder %s16, 1
      %p73 = por %p71, %p72
      %p74 = scmp.ne.s32.totalorder %s66, %s69
      %p75 = scmp.eq.s32.totalorder %s16, 0
      %p76 = por %p74, %p75
      %p77 = scmp.ne.s32.totalorder %s66, %s69
      %p78 = scmp.eq.s32.totalorder %s21, 1
      %p79 = por %p77, %p78
      %p80 = scmp.ne.s32.totalorder %s69, %s70
      %p81 = scmp.eq.s32.totalorder %s21, 0
      %p82 = por %p80, %p81
      %p83 = scmp.ne.s32.totalorder %s69, %s70
      %p84 = scmp.eq.s32.totalorder %s22, 1
      %p85 = por %p83, %p84
      %p87 = scmp.ne.s32.totalorder %s70, %s86
      %p88 = scmp.eq.s32.totalorder %s22, 0
      %p89 = por %p87, %p88
      %s91 = sadd.s32 %s90, 1
      %p94 = scmp.eq.s32.totalorder %s16, 1
      %p95 = scmp.ne.s32.totalorder %s90, %s92
      %p96 = scmp.eq.s32.totalorder %s16, 0
      %p97 = por %p95, %p96
      %p98 = scmp.ne.s32.totalorder %s90, %s92
      %p99 = scmp.eq.s32.totalorder %s21, 1
      %p100 = por %p98, %p99
      %p101 = scmp.ne.s32.totalorder %s92, %s93
      %p102 = scmp.eq.s32.totalorder %s21, 0
      %p103 = por %p101, %p102
      %p104 = scmp.ne.s32.totalorder %s92, %s93
      %p105 = scmp.eq.s32.totalorder %s22, 1
      %p106 = por %p104, %p105
      %p108 = scmp.ne.s32.totalorder %s93, %s107
      %p109 = scmp.eq.s32.totalorder %s22, 0
      %p110 = por %p108, %p109
      %s112 = sadd.s32 %s111, 1
      %p115 = scmp.eq.s32.totalorder %s16, 1
      %p116 = scmp.ne.s32.totalorder %s111, %s113
      %p117 = scmp.eq.s32.totalorder %s16, 0
      %p118 = por %p116, %p117
      %p119 = scmp.ne.s32.totalorder %s111, %s113
      %p120 = scmp.eq.s32.totalorder %s21, 1
      %p121 = por %p119, %p120
      %p122 = scmp.ne.s32.totalorder %s113, %s114
      %p123 = scmp.eq.s32.totalorder %s21, 0
      %p124 = por %p122, %p123
      %p125 = scmp.ne.s32.totalorder %s113, %s114
      %p126 = scmp.eq.s32.totalorder %s22, 1
      %p127 = por %p125, %p126
      %p129 = scmp.ne.s32.totalorder %s114, %s128
      %p130 = scmp.eq.s32.totalorder %s22, 0
      %p131 = por %p129, %p130
      %s132 = ssub.s32 %s24, %s31
      %s133 = ssub.s32 %s23, %s35
      %s134 = sor.u32 %s132, %s133
      %p135 = scmp.eq.s32.totalorder %s134, 0
      %s137 = sadd.s32 %s136, 1
      %s138 = scalar_select %p135, %s136, %s137
      %p141 = pneg %p135
      %p142 = scmp.eq.s32.totalorder %s16, 1
      %p143 = por %p141, %p142
      %p144 = scmp.ne.s32.totalorder %s136, %s139
      %p145 = scmp.eq.s32.totalorder %s16, 0
      %p146 = por %p144, %p145
      %p147 = scmp.ne.s32.totalorder %s136, %s139
      %p148 = scmp.eq.s32.totalorder %s21, 1
      %p149 = por %p147, %p148
      %p150 = scmp.ne.s32.totalorder %s139, %s140
      %p151 = scmp.eq.s32.totalorder %s21, 0
      %p152 = por %p150, %p151
      %p153 = scmp.ne.s32.totalorder %s139, %s140
      %p154 = scmp.eq.s32.totalorder %s22, 1
      %p155 = por %p153, %p154
      %p157 = scmp.ne.s32.totalorder %s140, %s156
      %p158 = scmp.eq.s32.totalorder %s22, 0
      %p159 = por %p157, %p158
      %p160 = scmp.le.s32.totalorder 1, %s16
      %p161 = scmp.lt.s32.totalorder %s16, 3
      %p162 = pnand %p160, %p161
      %p163 = pneg %p162
      // Predicated region
      $region9: #{nd_sincos_learnt_pe_forward.1} parent=5 // pred_check
        _
      $region10: #{nd_sincos_learnt_pe_forward.1} parent=5 // pred_check_branch
        %165 = sbr.rel (%p162) target = $region12
      $region11: #{nd_sincos_learnt_pe_forward.1} parent=5 // pred_region
        %s166 = ssub.s32 %s16, 1
        // Predicated region
        $region13: #{nd_sincos_learnt_pe_forward.1} parent=11 // pred_check
          %p167 = pneg %p103
        $region14: #{nd_sincos_learnt_pe_forward.1} parent=11 // pred_check_branch
          %169 = sbr.rel (%p167) target = $region16
        $region15: #{nd_sincos_learnt_pe_forward.1} parent=11 // pred_region
          _
        $region16: #{nd_sincos_learnt_pe_forward.1} parent=11 // pred_fallthru
          _
        // Predicated region
        $region17: #{nd_sincos_learnt_pe_forward.1} parent=11 // pred_check
          %p170 = pneg %p124
        $region18: #{nd_sincos_learnt_pe_forward.1} parent=11 // pred_check_branch
          %172 = sbr.rel (%p170) target = $region20
        $region19: #{nd_sincos_learnt_pe_forward.1} parent=11 // pred_region
          _
        $region20: #{nd_sincos_learnt_pe_forward.1} parent=11 // pred_fallthru
          _
      $region12: #{nd_sincos_learnt_pe_forward.1} parent=5 // pred_fallthru
        _
      %p173 = scmp.lt.s32.totalorder %s16, 2
      // Predicated region
      $region21: #{nd_sincos_learnt_pe_forward.1} parent=5 // pred_check
        %p174 = pneg %p173
      $region22: #{nd_sincos_learnt_pe_forward.1} parent=5 // pred_check_branch
        %176 = sbr.rel (%p174) target = $region24
      $region23: #{nd_sincos_learnt_pe_forward.1} parent=5 // pred_region
        // Predicated region
        $region25: #{nd_sincos_learnt_pe_forward.1} parent=23 // pred_check
          %p177 = pneg %p50
        $region26: #{nd_sincos_learnt_pe_forward.1} parent=23 // pred_check_branch
          %179 = sbr.rel (%p177) target = $region28
        $region27: #{nd_sincos_learnt_pe_forward.1} parent=23 // pred_region
          #allocation8 [shape = 'u32[6]{0}', space=smem, size = 0x18, scoped, tag = 'DMA stride descriptor']
          %s180 = sand.u32 %s40, 1
          %s181 = scalar_lea.sflag [#allocation4], %s180
          %s182 = sand.u32 %s40, 1
          %s183 = smul.addr %s182, 256
          %s184 = scalar_lea.vmem [#allocation3], %s183
          %s185 = smul.u32 2, %s24
          %s186 = smul.u32 16, %s23
          %s188 = ssub.s32 4096, 4096
          %189 = vsyncadd %s181, %s188
          %s190 = smul.addr %s185, 32
          %s191 = sadd.s32 %s186, %s190
          %s192 = smul.addr %s191, 128
          %s193 = scalar_lea.hbm %s0, %s192
          %s195 = sshll.u32 1, 14
          %s196 = sxor.u32 4294967295, %s195
          %s198 = sld [smem:[#allocation0]]
          %s199 = sadd.s32 2, %s198
          %s201 = sshll.u32 7, 26
          %s202 = sxor.u32 4294967295, %s201
          %s203 = sand.u32 0, %s202
          %s204 = sshll.u32 %s199, 26
          %s205 = sor.u32 %s203, %s204
          %s206 = sshll.u32 %s184, 4
          %s207 = int_to_ptr.vmem [resolvable:$true] %s206
          %213 = sst [smem:[#allocation8]] 4096
          %s214 = scalar_lea.smem [#allocation8], 1
          %215 = sst [smem:[%s214]] 2048
          %s216 = scalar_lea.smem [#allocation8], 2
          %217 = sst [smem:[%s216]] 16
          %s218 = scalar_lea.smem [#allocation8], 3
          %219 = sst [smem:[%s218]] 128
          %s220 = scalar_lea.smem [#allocation8], 4
          %221 = sst [smem:[%s220]] 128
          %s222 = scalar_lea.smem [#allocation8], 5
          %223 = sst [smem:[%s222]] 8
          %225 = dma.general %s193, 4096, %s207, %s181, [#allocation7], [#allocation8], %s205, 0
        $region28: #{nd_sincos_learnt_pe_forward.1} parent=23 // pred_fallthru
          _
        // Predicated region
        $region29: #{nd_sincos_learnt_pe_forward.1} parent=23 // pred_check
          %p226 = pneg %p76
        $region30: #{nd_sincos_learnt_pe_forward.1} parent=23 // pred_check_branch
          %228 = sbr.rel (%p226) target = $region32
        $region31: #{nd_sincos_learnt_pe_forward.1} parent=23 // pred_region
          %s229 = smul.u32 16, %s23
          %p230 = scmp.lt.s32.totalorder %s229, 31
          %s231 = scalar_select %p230, %s229, 31
          %s232 = smul.addr %s231, 8
          %s233 = scalar_lea.vmem %s1, %s232
          %s234 = smul.u32 16, %s23
        $region32: #{nd_sincos_learnt_pe_forward.1} parent=23 // pred_fallthru
          _
      $region24: #{nd_sincos_learnt_pe_forward.1} parent=5 // pred_fallthru
        _
      %p235 = scmp.le.s32.totalorder 1, %s16
      %p236 = scmp.lt.s32.totalorder %s16, 3
      %p237 = pnand %p235, %p236
      %p238 = pneg %p237
      // Predicated region
      $region33: #{nd_sincos_learnt_pe_forward.1} parent=5 // pred_check
        _
      $region34: #{nd_sincos_learnt_pe_forward.1} parent=5 // pred_check_branch
        %240 = sbr.rel (%p237) target = $region36
      $region35: #{nd_sincos_learnt_pe_forward.1} parent=5 // pred_region
        %s241 = ssub.s32 %s16, 1
        %s242 = sand.u32 %s43, 1
        %s243 = scalar_lea.sflag [#allocation4], %s242
        %s244 = sand.u32 %s43, 1
        %s245 = smul.addr %s244, 256
        %s246 = scalar_lea.vmem [#allocation3], %s245
        // Predicated region
        $region37: #{nd_sincos_learnt_pe_forward.1} parent=35 // pred_check
          %p247 = pneg %p56
        $region38: #{nd_sincos_learnt_pe_forward.1} parent=35 // pred_check_branch
          %249 = sbr.rel (%p247) target = $region40
        $region39: #{nd_sincos_learnt_pe_forward.1} parent=35 // pred_region
          %250 = dma.done %s243, 4096
        $region40: #{nd_sincos_learnt_pe_forward.1} parent=35 // pred_fallthru
          _
        %s251 = sand.u32 %s43, 1
        %s252 = scalar_lea.sflag [#allocation4], %s251
        %s253 = sand.u32 %s43, 1
        %s254 = smul.addr %s253, 256
        %s255 = scalar_lea.vmem [#allocation3], %s254
        %p256 = pneg %p56
        %p257 = pneg %p53
        %s258 = smul.u32 16, %s25
        %p259 = scmp.lt.s32.totalorder %s258, 31
        %s260 = scalar_select %p259, %s258, 31
        %s261 = smul.addr %s260, 8
        %s262 = scalar_lea.vmem %s1, %s261
        %p263 = pneg %p82
        %p264 = pneg %p79
        %p265 = pneg %p103
        %p266 = pneg %p100
        %p267 = pneg %p124
        %p268 = pneg %p121
        %p269 = pneg %p152
        %p270 = pneg %p149
        %s271 = sand.u32 %s139, 1
        %s272 = scalar_lea.sflag [#allocation5], %s271
        %s273 = sand.u32 %s139, 1
        %s274 = smul.addr %s273, 256
        %s275 = scalar_lea.vmem [#allocation6], %s274
        %s276 = smul.u32 2, %s26
        %s277 = smul.u32 16, %s25
        %s278 = smul.u32 16, %s25
        %p279 = scmp.lt.s32.totalorder %s278, 31
        %s280 = scalar_select %p279, %s278, 31
        %s281 = smul.addr %s280, 8
        %s282 = scalar_lea.vmem %s1, %s281
        %s283 = smul.u32 16, %s25
        %s284 = smul.u32 2, %s26
        %s285 = smul.u32 16, %s25
        %p286 = scmp.eq.s32.totalorder %s26, 0
        // Predicated region
        $region41: #{nd_sincos_learnt_pe_forward.1} parent=35 // pred_check
          %p287 = pneg %p286
        $region42: #{nd_sincos_learnt_pe_forward.1} parent=35 // pred_check_branch
          %289 = sbr.rel (%p287) target = $region44
        $region43: #{nd_sincos_learnt_pe_forward.1} parent=35 // pred_region
          %v290 = vld [vmem:[%s282] sm:$0xff]
          %v291 = vld [vmem:[%s282 + $0x8] sm:$0xff]
          %v292 = vld [vmem:[%s282 + $0x10] sm:$0xff]
          %v293 = vld [vmem:[%s282 + $0x18] sm:$0xff]
          %v294 = vld [vmem:[%s282 + $0x20] sm:$0xff]
          %v295 = vld [vmem:[%s282 + $0x28] sm:$0xff]
          %v296 = vld [vmem:[%s282 + $0x30] sm:$0xff]
          %v297 = vld [vmem:[%s282 + $0x38] sm:$0xff]
          %v298 = vld [vmem:[%s282 + $0x40] sm:$0xff]
          %v299 = vld [vmem:[%s282 + $0x48] sm:$0xff]
          %v300 = vld [vmem:[%s282 + $0x50] sm:$0xff]
          %v301 = vld [vmem:[%s282 + $0x58] sm:$0xff]
          %v302 = vld [vmem:[%s282 + $0x60] sm:$0xff]
          %v303 = vld [vmem:[%s282 + $0x68] sm:$0xff]
          %v304 = vld [vmem:[%s282 + $0x70] sm:$0xff]
          %v305 = vld [vmem:[%s282 + $0x78] sm:$0xff]
          %v306 = vld [vmem:[%s2] sm:$0xff]
          %v307 = vld [vmem:[%s2 + $0x8] sm:$0xff]
          %v308 = vld [vmem:[%s2 + $0x10] sm:$0xff]
          %v309 = vld [vmem:[%s2 + $0x18] sm:$0xff]
          %v310 = vld [vmem:[%s2 + $0x20] sm:$0xff]
          %v311 = vld [vmem:[%s2 + $0x28] sm:$0xff]
          %v312 = vld [vmem:[%s2 + $0x30] sm:$0xff]
          %v313 = vld [vmem:[%s2 + $0x38] sm:$0xff]
          %v314 = vld [vmem:[%s3] sm:$0x1]
          %v316 = vlaneseq
          %v317 = vshrl.u32 %v316, 7
          %v318 = vsub.s32 0, %v317
          %v319 = vrot.slane %v314, %v318
          %vm321 = vcmask 523264
          %v323 = vsel %vm321, %v290, 0
          %v326 = vsel %vm321, %v291, 0
          %v329 = vsel %vm321, %v292, 0
          %v332 = vsel %vm321, %v293, 0
          %v335 = vsel %vm321, %v294, 0
          %v338 = vsel %vm321, %v295, 0
          %v341 = vsel %vm321, %v296, 0
          %v344 = vsel %vm321, %v297, 0
          %v347 = vsel %vm321, %v298, 0
          %v350 = vsel %vm321, %v299, 0
          %v353 = vsel %vm321, %v300, 0
          %v356 = vsel %vm321, %v301, 0
          %v359 = vsel %vm321, %v302, 0
          %v362 = vsel %vm321, %v303, 0
          %v365 = vsel %vm321, %v304, 0
          %v368 = vsel %vm321, %v305, 0
          %370 = vmatprep.subr.mxu0 0.0
          %371 = vmatpush1.msra.mxu0 %v306
          %372 = vmatprep.subr.mxu0 0.0
          %373 = vmatpush1.msra.mxu0 %v307
          %374 = vmatprep.subr.mxu0 0.0
          %375 = vmatpush1.msra.mxu0 %v308
          %376 = vmatprep.subr.mxu0 0.0
          %377 = vmatpush1.msra.mxu0 %v309
          %378 = vmatprep.subr.mxu0 0.0
          %379 = vmatpush1.msra.mxu0 %v310
          %380 = vmatprep.subr.mxu0 0.0
          %381 = vmatpush1.msra.mxu0 %v311
          %382 = vmatprep.subr.mxu0 0.0
          %383 = vmatpush1.msra.mxu0 %v312
          %384 = vmatprep.subr.mxu0 0.0
          %385 = vmatpush1.msra.mxu0 %v313
          %386 = vmatprep.subr.mxu0 0.0
          %387 = vmatpush1.msra.mxu0 0.0
          %388 = vmatprep.subr.mxu0 0.0
          %389 = vmatpush1.msra.mxu0 0.0
          %390 = vmatprep.subr.mxu0 0.0
          %391 = vmatpush1.msra.mxu0 0.0
          %392 = vmatprep.subr.mxu0 0.0
          %393 = vmatpush1.msra.mxu0 0.0
          %394 = vmatprep.subr.mxu0 0.0
          %395 = vmatpush1.msra.mxu0 0.0
          %396 = vmatprep.subr.mxu0 0.0
          %397 = vmatpush1.msra.mxu0 0.0
          %398 = vmatprep.subr.mxu0 0.0
          %399 = vmatpush1.msra.mxu0 0.0
          %400 = vmatprep.subr.mxu0 0.0
          %401 = vmatpush1.msra.mxu0 0.0
          %402 = vmatprep.subr.mxu0 0.0
          %403 = vmatpush1.msra.mxu0 0.0
          %404 = vmatprep.subr.mxu0 0.0
          %405 = vmatpush1.msra.mxu0 0.0
          %406 = vmatprep.subr.mxu0 0.0
          %407 = vmatpush1.msra.mxu0 0.0
          %408 = vmatprep.subr.mxu0 0.0
          %409 = vmatpush1.msra.mxu0 0.0
          %410 = vmatprep.subr.mxu0 0.0
          %411 = vmatpush1.msra.mxu0 0.0
          %412 = vmatprep.subr.mxu0 0.0
          %413 = vmatpush1.msra.mxu0 0.0
          %414 = vmatprep.subr.mxu0 0.0
          %415 = vmatpush1.msra.mxu0 0.0
          %416 = vmatprep.subr.mxu0 0.0
          %417 = vmatpush1.msra.mxu0 0.0
          %418 = vmatprep.subr.mxu0 0.0
          %419 = vmatpush1.msra.mxu0 0.0
          %420 = vmatprep.subr.mxu0 0.0
          %421 = vmatpush1.msra.mxu0 0.0
          %422 = vmatprep.subr.mxu0 0.0
          %423 = vmatpush1.msra.mxu0 0.0
          %424 = vmatprep.subr.mxu0 0.0
          %425 = vmatpush1.msra.mxu0 0.0
          %426 = vmatprep.subr.mxu0 0.0
          %427 = vmatpush1.msra.mxu0 0.0
          %428 = vmatprep.subr.mxu0 0.0
          %429 = vmatpush1.msra.mxu0 0.0
          %430 = vmatprep.subr.mxu0 0.0
          %431 = vmatpush1.msra.mxu0 0.0
          %432 = vmatprep.subr.mxu0 0.0
          %433 = vmatpush1.msra.mxu0 0.0
          %434 = vmatprep.mubr.f32.mxu0 0.0
          %435 = vmatmul.mubr.f32.gmra.mrb[0].mxu0 %v323
          %v436 = vpop.f32.mrb[0].mxu0
          %v437 = vadd.f32 %v319, %v436
          %v438 = vpop.f32.mrb[0].mxu0
          %439 = vmatprep.mubr.f32.mxu0 0.0
          %440 = vmatmul.mubr.f32.gmra.mrb[0].mxu0 %v326
          %v441 = vpop.f32.mrb[0].mxu0
          %v442 = vadd.f32 %v319, %v441
          %v443 = vpop.f32.mrb[0].mxu0
          %444 = vmatprep.mubr.f32.mxu0 0.0
          %445 = vmatmul.mubr.f32.gmra.mrb[0].mxu0 %v329
          %v446 = vpop.f32.mrb[0].mxu0
          %v447 = vadd.f32 %v319, %v446
          %v448 = vpop.f32.mrb[0].mxu0
          %449 = vmatprep.mubr.f32.mxu0 0.0
          %450 = vmatmul.mubr.f32.gmra.mrb[0].mxu0 %v332
          %v451 = vpop.f32.mrb[0].mxu0
          %v452 = vadd.f32 %v319, %v451
          %v453 = vpop.f32.mrb[0].mxu0
          %454 = vmatprep.mubr.f32.mxu0 0.0
          %455 = vmatmul.mubr.f32.gmra.mrb[0].mxu0 %v335
          %v456 = vpop.f32.mrb[0].mxu0
          %v457 = vadd.f32 %v319, %v456
          %v458 = vpop.f32.mrb[0].mxu0
          %459 = vmatprep.mubr.f32.mxu0 0.0
          %460 = vmatmul.mubr.f32.gmra.mrb[0].mxu0 %v338
          %v461 = vpop.f32.mrb[0].mxu0
          %v462 = vadd.f32 %v319, %v461
          %v463 = vpop.f32.mrb[0].mxu0
          %464 = vmatprep.mubr.f32.mxu0 0.0
          %465 = vmatmul.mubr.f32.gmra.mrb[0].mxu0 %v341
          %v466 = vpop.f32.mrb[0].mxu0
          %v467 = vadd.f32 %v319, %v466
          %v468 = vpop.f32.mrb[0].mxu0
          %469 = vmatprep.mubr.f32.mxu0 0.0
          %470 = vmatmul.mubr.f32.gmra.mrb[0].mxu0 %v344
          %v471 = vpop.f32.mrb[0].mxu0
          %v472 = vadd.f32 %v319, %v471
          %v473 = vpop.f32.mrb[0].mxu0
          %474 = vmatprep.mubr.f32.mxu0 0.0
          %475 = vmatmul.mubr.f32.gmra.mrb[0].mxu0 %v347
          %v476 = vpop.f32.mrb[0].mxu0
          %v477 = vadd.f32 %v319, %v476
          %v478 = vpop.f32.mrb[0].mxu0
          %479 = vmatprep.mubr.f32.mxu0 0.0
          %480 = vmatmul.mubr.f32.gmra.mrb[0].mxu0 %v350
          %v481 = vpop.f32.mrb[0].mxu0
          %v482 = vadd.f32 %v319, %v481
          %v483 = vpop.f32.mrb[0].mxu0
          %484 = vmatprep.mubr.f32.mxu0 0.0
          %485 = vmatmul.mubr.f32.gmra.mrb[0].mxu0 %v353
          %v486 = vpop.f32.mrb[0].mxu0
          %v487 = vadd.f32 %v319, %v486
          %v488 = vpop.f32.mrb[0].mxu0
          %489 = vmatprep.mubr.f32.mxu0 0.0
          %490 = vmatmul.mubr.f32.gmra.mrb[0].mxu0 %v356
          %v491 = vpop.f32.mrb[0].mxu0
          %v492 = vadd.f32 %v319, %v491
          %v493 = vpop.f32.mrb[0].mxu0
          %494 = vmatprep.mubr.f32.mxu0 0.0
          %495 = vmatmul.mubr.f32.gmra.mrb[0].mxu0 %v359
          %v496 = vpop.f32.mrb[0].mxu0
          %v497 = vadd.f32 %v319, %v496
          %v498 = vpop.f32.mrb[0].mxu0
          %499 = vmatprep.mubr.f32.mxu0 0.0
          %500 = vmatmul.mubr.f32.gmra.mrb[0].mxu0 %v362
          %v501 = vpop.f32.mrb[0].mxu0
          %v502 = vadd.f32 %v319, %v501
          %v503 = vpop.f32.mrb[0].mxu0
          %504 = vmatprep.mubr.f32.mxu0 0.0
          %505 = vmatmul.mubr.f32.gmra.mrb[0].mxu0 %v365
          %v506 = vpop.f32.mrb[0].mxu0
          %v507 = vadd.f32 %v319, %v506
          %v508 = vpop.f32.mrb[0].mxu0
          %509 = vmatprep.mubr.f32.mxu0 0.0
          %510 = vmatmul.mubr.f32.gmra.mrb[0].mxu0 %v368
          %v511 = vpop.f32.mrb[0].mxu0
          %v512 = vadd.f32 %v319, %v511
          %v513 = vpop.f32.mrb[0].mxu0
          %514 = vdwg.mxu0
          %515 = vst [vmem:[#allocation2] sm:$0xff] %v437
          %516 = vst [vmem:[#allocation2 + $0x8] sm:$0xff] %v442
          %517 = vst [vmem:[#allocation2 + $0x10] sm:$0xff] %v447
          %518 = vst [vmem:[#allocation2 + $0x18] sm:$0xff] %v452
          %519 = vst [vmem:[#allocation2 + $0x20] sm:$0xff] %v457
          %520 = vst [vmem:[#allocation2 + $0x28] sm:$0xff] %v462
          %521 = vst [vmem:[#allocation2 + $0x30] sm:$0xff] %v467
          %522 = vst [vmem:[#allocation2 + $0x38] sm:$0xff] %v472
          %523 = vst [vmem:[#allocation2 + $0x40] sm:$0xff] %v477
          %524 = vst [vmem:[#allocation2 + $0x48] sm:$0xff] %v482
          %525 = vst [vmem:[#allocation2 + $0x50] sm:$0xff] %v487
          %526 = vst [vmem:[#allocation2 + $0x58] sm:$0xff] %v492
          %527 = vst [vmem:[#allocation2 + $0x60] sm:$0xff] %v497
          %528 = vst [vmem:[#allocation2 + $0x68] sm:$0xff] %v502
          %529 = vst [vmem:[#allocation2 + $0x70] sm:$0xff] %v507
          %530 = vst [vmem:[#allocation2 + $0x78] sm:$0xff] %v512
        $region44: #{nd_sincos_learnt_pe_forward.1} parent=35 // pred_fallthru
          _
        %v531 = vld [vmem:[%s246] sm:$0xff]
        %v532 = vld [vmem:[%s246 + $0x8] sm:$0xff]
        %v533 = vld [vmem:[%s246 + $0x10] sm:$0xff]
        %v534 = vld [vmem:[%s246 + $0x18] sm:$0xff]
        %v535 = vld [vmem:[%s246 + $0x20] sm:$0xff]
        %v536 = vld [vmem:[%s246 + $0x28] sm:$0xff]
        %v537 = vld [vmem:[%s246 + $0x30] sm:$0xff]
        %v538 = vld [vmem:[%s246 + $0x38] sm:$0xff]
        %v539 = vld [vmem:[%s246 + $0x40] sm:$0xff]
        %v540 = vld [vmem:[%s246 + $0x48] sm:$0xff]
        %v541 = vld [vmem:[%s246 + $0x50] sm:$0xff]
        %v542 = vld [vmem:[%s246 + $0x58] sm:$0xff]
        %v543 = vld [vmem:[%s246 + $0x60] sm:$0xff]
        %v544 = vld [vmem:[%s246 + $0x68] sm:$0xff]
        %v545 = vld [vmem:[%s246 + $0x70] sm:$0xff]
        %v546 = vld [vmem:[%s246 + $0x78] sm:$0xff]
        %v547 = vld [vmem:[%s246 + $0x80] sm:$0xff]
        %v548 = vld [vmem:[%s246 + $0x88] sm:$0xff]
        %v549 = vld [vmem:[%s246 + $0x90] sm:$0xff]
        %v550 = vld [vmem:[%s246 + $0x98] sm:$0xff]
        %v551 = vld [vmem:[%s246 + $0xa0] sm:$0xff]
        %v552 = vld [vmem:[%s246 + $0xa8] sm:$0xff]
        %v553 = vld [vmem:[%s246 + $0xb0] sm:$0xff]
        %v554 = vld [vmem:[%s246 + $0xb8] sm:$0xff]
        %v555 = vld [vmem:[%s246 + $0xc0] sm:$0xff]
        %v556 = vld [vmem:[%s246 + $0xc8] sm:$0xff]
        %v557 = vld [vmem:[%s246 + $0xd0] sm:$0xff]
        %v558 = vld [vmem:[%s246 + $0xd8] sm:$0xff]
        %v559 = vld [vmem:[%s246 + $0xe0] sm:$0xff]
        %v560 = vld [vmem:[%s246 + $0xe8] sm:$0xff]
        %v561 = vld [vmem:[%s246 + $0xf0] sm:$0xff]
        %v562 = vld [vmem:[%s246 + $0xf8] sm:$0xff]
        %v563 = vld [vmem:[#allocation2] sm:$0xff]
        %v564 = vld [vmem:[#allocation2 + $0x8] sm:$0xff]
        %v565 = vld [vmem:[#allocation2 + $0x10] sm:$0xff]
        %v566 = vld [vmem:[#allocation2 + $0x18] sm:$0xff]
        %v567 = vld [vmem:[#allocation2 + $0x20] sm:$0xff]
        %v568 = vld [vmem:[#allocation2 + $0x28] sm:$0xff]
        %v569 = vld [vmem:[#allocation2 + $0x30] sm:$0xff]
        %v570 = vld [vmem:[#allocation2 + $0x38] sm:$0xff]
        %v571 = vld [vmem:[#allocation2 + $0x40] sm:$0xff]
        %v572 = vld [vmem:[#allocation2 + $0x48] sm:$0xff]
        %v573 = vld [vmem:[#allocation2 + $0x50] sm:$0xff]
        %v574 = vld [vmem:[#allocation2 + $0x58] sm:$0xff]
        %v575 = vld [vmem:[#allocation2 + $0x60] sm:$0xff]
        %v576 = vld [vmem:[#allocation2 + $0x68] sm:$0xff]
        %v577 = vld [vmem:[#allocation2 + $0x70] sm:$0xff]
        %v578 = vld [vmem:[#allocation2 + $0x78] sm:$0xff]
        %v579 = vadd.f32 %v531, %v563
        %v580 = vadd.f32 %v532, %v564
        %v581 = vadd.f32 %v533, %v565
        %v582 = vadd.f32 %v534, %v566
        %v583 = vadd.f32 %v535, %v567
        %v584 = vadd.f32 %v536, %v568
        %v585 = vadd.f32 %v537, %v569
        %v586 = vadd.f32 %v538, %v570
        %v587 = vadd.f32 %v539, %v571
        %v588 = vadd.f32 %v540, %v572
        %v589 = vadd.f32 %v541, %v573
        %v590 = vadd.f32 %v542, %v574
        %v591 = vadd.f32 %v543, %v575
        %v592 = vadd.f32 %v544, %v576
        %v593 = vadd.f32 %v545, %v577
        %v594 = vadd.f32 %v546, %v578
        %v595 = vadd.f32 %v547, %v563
        %v596 = vadd.f32 %v548, %v564
        %v597 = vadd.f32 %v549, %v565
        %v598 = vadd.f32 %v550, %v566
        %v599 = vadd.f32 %v551, %v567
        %v600 = vadd.f32 %v552, %v568
        %v601 = vadd.f32 %v553, %v569
        %v602 = vadd.f32 %v554, %v570
        %v603 = vadd.f32 %v555, %v571
        %v604 = vadd.f32 %v556, %v572
        %v605 = vadd.f32 %v557, %v573
        %v606 = vadd.f32 %v558, %v574
        %v607 = vadd.f32 %v559, %v575
        %v608 = vadd.f32 %v560, %v576
        %v609 = vadd.f32 %v561, %v577
        %v610 = vadd.f32 %v562, %v578
        %611 = vst [vmem:[%s275] sm:$0xff] %v579
        %612 = vst [vmem:[%s275 + $0x8] sm:$0xff] %v580
        %613 = vst [vmem:[%s275 + $0x10] sm:$0xff] %v581
        %614 = vst [vmem:[%s275 + $0x18] sm:$0xff] %v582
        %615 = vst [vmem:[%s275 + $0x20] sm:$0xff] %v583
        %616 = vst [vmem:[%s275 + $0x28] sm:$0xff] %v584
        %617 = vst [vmem:[%s275 + $0x30] sm:$0xff] %v585
        %618 = vst [vmem:[%s275 + $0x38] sm:$0xff] %v586
        %619 = vst [vmem:[%s275 + $0x40] sm:$0xff] %v587
        %620 = vst [vmem:[%s275 + $0x48] sm:$0xff] %v588
        %621 = vst [vmem:[%s275 + $0x50] sm:$0xff] %v589
        %622 = vst [vmem:[%s275 + $0x58] sm:$0xff] %v590
        %623 = vst [vmem:[%s275 + $0x60] sm:$0xff] %v591
        %624 = vst [vmem:[%s275 + $0x68] sm:$0xff] %v592
        %625 = vst [vmem:[%s275 + $0x70] sm:$0xff] %v593
        %626 = vst [vmem:[%s275 + $0x78] sm:$0xff] %v594
        %627 = vst [vmem:[%s275 + $0x80] sm:$0xff] %v595
        %628 = vst [vmem:[%s275 + $0x88] sm:$0xff] %v596
        %629 = vst [vmem:[%s275 + $0x90] sm:$0xff] %v597
        %630 = vst [vmem:[%s275 + $0x98] sm:$0xff] %v598
        %631 = vst [vmem:[%s275 + $0xa0] sm:$0xff] %v599
        %632 = vst [vmem:[%s275 + $0xa8] sm:$0xff] %v600
        %633 = vst [vmem:[%s275 + $0xb0] sm:$0xff] %v601
        %634 = vst [vmem:[%s275 + $0xb8] sm:$0xff] %v602
        %635 = vst [vmem:[%s275 + $0xc0] sm:$0xff] %v603
        %636 = vst [vmem:[%s275 + $0xc8] sm:$0xff] %v604
        %637 = vst [vmem:[%s275 + $0xd0] sm:$0xff] %v605
        %638 = vst [vmem:[%s275 + $0xd8] sm:$0xff] %v606
        %639 = vst [vmem:[%s275 + $0xe0] sm:$0xff] %v607
        %640 = vst [vmem:[%s275 + $0xe8] sm:$0xff] %v608
        %641 = vst [vmem:[%s275 + $0xf0] sm:$0xff] %v609
        %642 = vst [vmem:[%s275 + $0xf8] sm:$0xff] %v610
        %s643 = sand.u32 %s139, 1
        %s644 = scalar_lea.sflag [#allocation5], %s643
        %s645 = sand.u32 %s139, 1
        %s646 = smul.addr %s645, 256
        %s647 = scalar_lea.vmem [#allocation6], %s646
        // Predicated region
        $region45: #{nd_sincos_learnt_pe_forward.1} parent=35 // pred_check
          %p648 = pneg %p149
        $region46: #{nd_sincos_learnt_pe_forward.1} parent=35 // pred_check_branch
          %650 = sbr.rel (%p648) target = $region48
        $region47: #{nd_sincos_learnt_pe_forward.1} parent=35 // pred_region
          #allocation10 [shape = 'u32[6]{0}', space=smem, size = 0x18, scoped, tag = 'DMA stride descriptor']
          %s651 = smul.u32 2, %s26
          %s652 = smul.u32 16, %s25
          %s654 = ssub.s32 4096, 4096
          %655 = vsyncadd %s644, %s654
          %s656 = smul.addr %s651, 32
          %s657 = sadd.s32 %s652, %s656
          %s658 = smul.addr %s657, 128
          %s659 = scalar_lea.hbm %s4, %s658
          %s661 = sshll.u32 1, 14
          %s662 = sxor.u32 4294967295, %s661
          %s665 = sshll.u32 7, 18
          %s666 = sxor.u32 4294967295, %s665
          %s667 = sand.u32 0, %s666
          %s669 = sor.u32 %s667, 0
          %s671 = sshll.u32 3, 24
          %s672 = sxor.u32 4294967295, %s671
          %s673 = sand.u32 %s669, %s672
          %s675 = sor.u32 %s673, 0
          %s676 = sshll.u32 %s647, 4
          %s677 = int_to_ptr.vmem [resolvable:$true] %s676
          %683 = sst [smem:[#allocation10]] 2048
          %s684 = scalar_lea.smem [#allocation10], 1
          %685 = sst [smem:[%s684]] 4096
          %s686 = scalar_lea.smem [#allocation10], 2
          %687 = sst [smem:[%s686]] 16
          %s688 = scalar_lea.smem [#allocation10], 3
          %689 = sst [smem:[%s688]] 128
          %s690 = scalar_lea.smem [#allocation10], 4
          %691 = sst [smem:[%s690]] 128
          %s692 = scalar_lea.smem [#allocation10], 5
          %693 = sst [smem:[%s692]] 8
          %695 = dma.general %s677, 4096, %s659, %s644, [#allocation9], [#allocation10], %s675, 0
        $region48: #{nd_sincos_learnt_pe_forward.1} parent=35 // pred_fallthru
          _
      $region36: #{nd_sincos_learnt_pe_forward.1} parent=5 // pred_fallthru
        _
      %p696 = scmp.le.s32.totalorder 2, %s16
      // Predicated region
      $region49: #{nd_sincos_learnt_pe_forward.1} parent=5 // pred_check
        %p697 = pneg %p696
      $region50: #{nd_sincos_learnt_pe_forward.1} parent=5 // pred_check_branch
        %699 = sbr.rel (%p697) target = $region52
      $region51: #{nd_sincos_learnt_pe_forward.1} parent=5 // pred_region
        %s700 = ssub.s32 %s16, 2
        // Predicated region
        $region53: #{nd_sincos_learnt_pe_forward.1} parent=51 // pred_check
          %p701 = pneg %p155
        $region54: #{nd_sincos_learnt_pe_forward.1} parent=51 // pred_check_branch
          %703 = sbr.rel (%p701) target = $region56
        $region55: #{nd_sincos_learnt_pe_forward.1} parent=51 // pred_region
          %s704 = sand.u32 %s140, 1
          %s705 = scalar_lea.sflag [#allocation5], %s704
          %s706 = sand.u32 %s140, 1
          %s707 = smul.addr %s706, 256
          %s708 = scalar_lea.vmem [#allocation6], %s707
          %709 = dma.done %s705, 4096
        $region56: #{nd_sincos_learnt_pe_forward.1} parent=51 // pred_fallthru
          _
      $region52: #{nd_sincos_learnt_pe_forward.1} parent=5 // pred_fallthru
        _
    $region6: #{nd_sincos_learnt_pe_forward.1} parent=1 // loop_footer
      %s20 = sadd.s32 1, %s16
    $region7: #{nd_sincos_learnt_pe_forward.1} parent=1 // loop_footer_branch
      %15 = sbr.rel target = $region3
    $region8: #{nd_sincos_learnt_pe_forward.1} parent=1 // loop_exit
      _
    %710 = vsyncpa [#allocation4], 1
    %s711 = scalar_lea.sflag [#allocation4], 1
    %712 = vsyncpa %s711, 1
    %713 = vsyncpa [#allocation5], 1
    %s714 = scalar_lea.sflag [#allocation5], 1
    %715 = vsyncpa %s714, 1

</llo_original>
